<compile_context>
chip_gen: v7x
topology: tpu7x:2x2x1
jax: 0.10.0
libtpu: 0.0.40
codegen_flags: <defaults>
</compile_context>

<pallas_src>
import jax
import jax.numpy as jnp
from jax.experimental import pallas as pl
from jax.experimental.pallas import tpu as pltpu

_LANE = 128


def _normalize_kernel(mean_ref, inv_std_ref, x_ref, o_ref):
    # Params are (rows, 1) f32 columns broadcast over the lane axis on the VPU.
    # Compute in f32, cast on store (free: the op is HBM-bandwidth bound).
    x = x_ref[...].astype(jnp.float32)
    o_ref[...] = ((x - mean_ref[...]) * inv_std_ref[...]).astype(o_ref.dtype)


def _device_budget():
    """(target_block_bytes, max_block_bytes, vmem_limit_bytes) per TPU generation."""
    try:
        kind = jax.devices()[0].device_kind.lower()
    except Exception:
        kind = ""
    if "v5 lite" in kind or "v5lite" in kind or "v5e" in kind:
        # v5e: ~0.8 TB/s; 2 MiB tiles already make the ~0.35us step overhead <5%.
        # 2x(in+out) at the 4 MiB cap = 16 MiB < 32 MiB scoped (128 MiB physical).
        return 2 << 20, 4 << 20, 32 << 20
    if "7" in kind:
        # v7x: ~3.2 TB/s per TC but only 64 MiB VMEM/TC -> larger tiles to
        # amortise per-step overhead; 2x(in+out) at 8 MiB cap = 32 MiB < 48 MiB.
        return 6 << 20, 8 << 20, 48 << 20
    # v6e / v5p / default: 128 MiB VMEM, ~1.4 TB/s.
    return 4 << 20, 8 << 20, 48 << 20


def _pick_blocks(R, L, bpe, target_bytes, max_bytes):
    """Choose (row_block, lane_block). No input padding: the caller uses a cdiv
    grid and Pallas clips the edge blocks. Legality: each block dim is either a
    multiple of the native tile (sublane / 128) or spans the full array dim."""
    sublane = max(1, (8 * 4) // bpe)          # 8 f32, 16 bf16, 32 int8/fp8
    row_bytes = L * bpe

    if row_bytes * sublane > max_bytes:
        # Very long rows (huge images): tile the lane axis too.
        lane_block = max(_LANE, (max_bytes // (sublane * bpe)) // _LANE * _LANE)
        row_block = sublane if R >= sublane else R
        return row_block, lane_block

    # One block spans full rows; pick enough rows to hit the byte target
    # (rounded DOWN to the native sublane packing so we never exceed max_bytes).
    rows_wanted = max(1, target_bytes // row_bytes)
    rb = max(sublane, (rows_wanted // sublane) * sublane)
    row_block = R if rb >= R else rb
    return row_block, L


def c2i_normalize(x, mean, std, *, target_bytes=None, max_bytes=None,
                  vmem_limit=None):
    """Pallas TPU equivalent of C2INormalize.forward: (x - mean) / std.

    x: (N, C, H, W); mean, std: (C,), broadcast over N, H, W.
    """
    N, C, H, W = x.shape
    R, L = N * C, H * W
    dtype = x.dtype
    bpe = jnp.dtype(dtype).itemsize

    d_target, d_max, d_vmem = _device_budget()
    target_bytes = d_target if target_bytes is None else target_bytes
    max_bytes = d_max if max_bytes is None else max_bytes
    vmem_limit = d_vmem if vmem_limit is None else vmem_limit

    # Per-row (image, channel) constants in f32; row r -> channel r % C.
    mean_f32 = mean.astype(jnp.float32)
    inv_std_f32 = 1.0 / std.astype(jnp.float32)
    row_mean = jnp.tile(mean_f32, N)[:, None]      # (R, 1)
    row_inv = jnp.tile(inv_std_f32, N)[:, None]    # (R, 1)

    x2 = x.reshape(R, L)                           # lane-dense 2-D view (free reshape)

    row_block, lane_block = _pick_blocks(R, L, bpe, target_bytes, max_bytes)
    grid = (pl.cdiv(R, row_block), pl.cdiv(L, lane_block))

    out2 = pl.pallas_call(
        _normalize_kernel,
        out_shape=jax.ShapeDtypeStruct((R, L), dtype),
        grid_spec=pltpu.PrefetchScalarGridSpec(
            num_scalar_prefetch=0,
            grid=grid,
            in_specs=[
                # Param index maps ignore the lane axis -> same block is reused
                # across the inner lane sweep (no re-DMA per lane tile).
                pl.BlockSpec((row_block, 1), lambda i, j: (i, 0)),           # mean
                pl.BlockSpec((row_block, 1), lambda i, j: (i, 0)),           # 1/std
                pl.BlockSpec((row_block, lane_block), lambda i, j: (i, j)),  # x
            ],
            out_specs=pl.BlockSpec((row_block, lane_block), lambda i, j: (i, j)),
        ),
        compiler_params=pltpu.CompilerParams(
            # "parallel" on both axes: shards the grid across the 2 TensorCores
            # on v7x; measured no-op on single-TC v5e/v6e.
            dimension_semantics=("parallel", "parallel"),
            vmem_limit_bytes=vmem_limit,
        ),
        cost_estimate=pl.CostEstimate(
            flops=2 * R * L,
            transcendentals=0,
            bytes_accessed=2 * R * L * bpe,
        ),
    )(row_mean, row_inv, x2)

    return out2.reshape(N, C, H, W)


if __name__ == "__main__":
    # Constants from the module's __init__ (no trainable params / checkpoint).
    mean = jnp.asarray([-0.03, -0.088, -0.188], dtype=jnp.float32)
    std = jnp.asarray([0.458, 0.448, 0.45], dtype=jnp.float32)

    key = jax.random.PRNGKey(0)

    # (shape, block-size overrides) -- the overrides force the multi-block /
    # edge-clipping / lane-tiled code paths at small sizes.
    cases = [
        ((2, 3, 16, 16), {}),                              # aligned, single block
        ((3, 3, 20, 20), {}),                              # full-extent 400-lane block
        ((5, 3, 32, 32), dict(target_bytes=32 * 1024,
                              max_bytes=64 * 1024)),       # partial row edge block
        ((2, 3, 25, 40), dict(target_bytes=16 * 1024,
                              max_bytes=16 * 1024)),       # lane-tiled + partial lane edge
    ]
    for shape, overrides in cases:
        key, sub = jax.random.split(key)
        x = jax.random.uniform(sub, shape, dtype=jnp.float32, minval=-1.0, maxval=1.0)

        out = jax.block_until_ready(c2i_normalize(x, mean, std, **overrides))

        # Reference with the same broadcasting as the PyTorch module.
        ref = (x - mean[None, :, None, None]) / std[None, :, None, None]
        assert out.shape == x.shape and out.dtype == x.dtype
        assert jnp.allclose(out, ref, rtol=1e-6, atol=1e-6), shape

    print("KERNEL_OK")
</pallas_src>

<mosaic_0001>
module attributes {stable_mosaic.version = 11 : i64} {
  func.func @_normalize_kernel(%arg0: i32, %arg1: i32, %arg2: memref<6x1xf32, #tpu.memory_space<vmem>>, %arg3: memref<6x1xf32, #tpu.memory_space<vmem>>, %arg4: memref<6x256xf32, #tpu.memory_space<vmem>>, %arg5: memref<6x256xf32, #tpu.memory_space<vmem>>) attributes {dimension_semantics = [#tpu.dimension_semantics<parallel>, #tpu.dimension_semantics<parallel>], iteration_bounds = array<i64: 1, 1>, scalar_prefetch = 0 : i64, scratch_operands = 0 : i64, tpu.core_type = #tpu.core_type<tc>, window_params = [{transform_indices = @transform_0, window_bounds = array<i64: 6, 1>}, {transform_indices = @transform_1, window_bounds = array<i64: 6, 1>}, {transform_indices = @transform_2, window_bounds = array<i64: 6, 256>}, {transform_indices = @transform_3, window_bounds = array<i64: 6, 256>}]} {
    %c0 = arith.constant 0 : index
    %c0_0 = arith.constant 0 : index
    %0 = vector.load %arg4[%c0, %c0_0] : memref<6x256xf32, #tpu.memory_space<vmem>>, vector<6x256xf32>
    %c0_1 = arith.constant 0 : index
    %c0_2 = arith.constant 0 : index
    %1 = vector.load %arg2[%c0_1, %c0_2] : memref<6x1xf32, #tpu.memory_space<vmem>>, vector<6x1xf32>
    %2 = vector.broadcast %1 : vector<6x1xf32> to vector<6x256xf32>
    %3 = arith.subf %0, %2 : vector<6x256xf32>
    %c0_3 = arith.constant 0 : index
    %c0_4 = arith.constant 0 : index
    %4 = vector.load %arg3[%c0_3, %c0_4] : memref<6x1xf32, #tpu.memory_space<vmem>>, vector<6x1xf32>
    %5 = vector.broadcast %4 : vector<6x1xf32> to vector<6x256xf32>
    %6 = arith.mulf %3, %5 : vector<6x256xf32>
    %c0_5 = arith.constant 0 : index
    %c0_6 = arith.constant 0 : index
    %7 = vector.load %arg5[%c0_5, %c0_6] : memref<6x256xf32, #tpu.memory_space<vmem>>, vector<6x256xf32>
    tpu.vector_store %arg5[%c0_5, %c0_6], %6 {strides = array<i32>} : memref<6x256xf32, #tpu.memory_space<vmem>>, vector<6x256xf32>,
    return
  }
  func.func @transform_0(%arg0: i32, %arg1: i32) -> (i32, i32) {
    %c0_i32 = arith.constant 0 : i32
    %c0_i32_0 = arith.constant 0 : i32
    return %arg0, %c0_i32 : i32, i32
  }
  func.func @transform_1(%arg0: i32, %arg1: i32) -> (i32, i32) {
    %c0_i32 = arith.constant 0 : i32
    %c0_i32_0 = arith.constant 0 : i32
    return %arg0, %c0_i32 : i32, i32
  }
  func.func @transform_2(%arg0: i32, %arg1: i32) -> (i32, i32) {
    %c0_i32 = arith.constant 0 : i32
    return %arg0, %arg1 : i32, i32
  }
  func.func @transform_3(%arg0: i32, %arg1: i32) -> (i32, i32) {
    %c0_i32 = arith.constant 0 : i32
    return %arg0, %arg1 : i32, i32
  }
}

</mosaic_0001>

<llo_original>
// kernel: tpu_custom_call.1
$region0: #{tpu_custom_call.1}
  #allocation0 [shape = 'u32[]', space=smem, size = 0x4, offset = 0x4, fixed_abs, tag = 'smem constant byte address 0x4 - core index']
  #allocation1 [shape = 'u32[144,128]{1,0:T(1,128)}', space=vmem, size = 0x12000, scoped, tag = 'internal scratch']
  %s0 = inlined_call_operand.vmem [shape: f32[6,1], index: 0, kind: input, shape index: {}]
  %s1 = inlined_call_operand.vmem [shape: f32[6,1], index: 1, kind: input, shape index: {}]
  %s2 = inlined_call_operand.vmem [shape: f32[6,256], index: 2, kind: input, shape index: {}]
  %s3 = inlined_call_operand.hbm [shape: f32[6,256], index: 3, kind: output, shape index: {}]
  %s4 = sld [smem:[#allocation0]]
  $region22: #{tpu_custom_call.1} parent=0
    _
  %s6 = ssub.s32 1, %s4
  %s7 = scalar_select 0, %s6, %s4
  $region1: #{tpu_custom_call.1} parent=0
    #allocation2 [shape = 'u8[8192]{0}', space=vmem, size = 0x2000, scoped, tag = 'output window, operand 0, single buffered']
    #allocation3 [shape = 's32[1]{0}', space=sflag, size = 0x4, scoped, tag = 'scoped memory for tpu_custom_call.1']
    %8 = vsyncpa [#allocation3], 0
    // Predicated region
    $region2: #{tpu_custom_call.1} parent=1 // pred_check
      _
    $region3: #{tpu_custom_call.1} parent=1 // pred_check_branch
      %10 = sbr.rel (0) target = $region5
    $region4: #{tpu_custom_call.1} parent=1 // pred_region
      _
    $region5: #{tpu_custom_call.1} parent=1 // pred_fallthru
      _
    // Predicated region
    $region6: #{tpu_custom_call.1} parent=1 // pred_check
      _
    $region7: #{tpu_custom_call.1} parent=1 // pred_check_branch
      %12 = sbr.rel (0) target = $region9
    $region8: #{tpu_custom_call.1} parent=1 // pred_region
      _
    $region9: #{tpu_custom_call.1} parent=1 // pred_fallthru
      _
    // Predicated region
    $region10: #{tpu_custom_call.1} parent=1 // pred_check
      _
    $region11: #{tpu_custom_call.1} parent=1 // pred_check_branch
      %14 = sbr.rel (0) target = $region13
    $region12: #{tpu_custom_call.1} parent=1 // pred_region
      _
    $region13: #{tpu_custom_call.1} parent=1 // pred_fallthru
      _
    %v15 = vld [vmem:[%s2] sm:$0x3f]
    %v16 = vld [vmem:[%s2 + $0x8] sm:$0x3f]
    %v17 = vld [vmem:[%s0] sm:$0x3f]
    %19 = vset.pattern.permute.xlu0 0
    %20 = vperm.xlu0 %19, %v17
    %v21 = vpop.permute.xlu0 %20
    %v23 = vsub.f32 %v15, %v21
    %v24 = vsub.f32 %v16, %v21
    %v25 = vld [vmem:[%s1] sm:$0x3f]
    %27 = vset.pattern.permute.xlu0 0
    %28 = vperm.xlu0 %27, %v25
    %v29 = vpop.permute.xlu0 %28
    %v31 = vmul.f32 %v23, %v29
    %v32 = vmul.f32 %v24, %v29
    %33 = vst [vmem:[#allocation2] sm:$0x3f] %v31
    %34 = vst [vmem:[#allocation2 + $0x8] sm:$0x3f] %v32
    // Predicated region
    $region14: #{tpu_custom_call.1} parent=1 // pred_check
      _
    $region15: #{tpu_custom_call.1} parent=1 // pred_check_branch
      %36 = sbr.rel (0) target = $region17
    $region16: #{tpu_custom_call.1} parent=1 // pred_region
      %s38 = ssub.s32 256, 256
      %39 = vsyncadd [#allocation3], %s38
      %s41 = sshll.u32 [#allocation2], 4
      %s42 = int_to_ptr.vmem [resolvable:$true] %s41
      %44 = dma.vmem_to_hbm [thread:$0]  %s42, 256, %s3, [#allocation3]
    $region17: #{tpu_custom_call.1} parent=1 // pred_fallthru
      _
    // Predicated region
    $region18: #{tpu_custom_call.1} parent=1 // pred_check
      _
    $region19: #{tpu_custom_call.1} parent=1 // pred_check_branch
      %46 = sbr.rel (0) target = $region21
    $region20: #{tpu_custom_call.1} parent=1 // pred_region
      %47 = dma.done [#allocation3], 256
    $region21: #{tpu_custom_call.1} parent=1 // pred_fallthru
      _
    %48 = vsyncpa [#allocation3], 1

</llo_original>
